<compile_context>
chip_gen: v7x
topology: tpu7x:2x2x1
jax: 0.10.0
libtpu: 0.0.40
codegen_flags: <defaults>
</compile_context>

<pallas_src>
import math

import jax
import jax.numpy as jnp
from jax.experimental import pallas as pl
from jax.experimental.pallas import tpu as pltpu


def _random_init_kernel(u0_ref, v0_ref, u_ref, v_ref):
    # u0_ref: (1, G*M*R), v0_ref: (1, G*N*R)    -- same block every grid step
    # u_ref : (TB, G*M*R), v_ref: (TB, G*N*R)   -- one TB-row slab of the outputs
    u_ref[...] = jnp.broadcast_to(u0_ref[...], u_ref.shape)
    v_ref[...] = jnp.broadcast_to(v0_ref[...], v_ref.shape)


def _sublane_multiple(dtype) -> int:
    # f32 -> 8, bf16 -> 16, int8/fp8 -> 32 (sub-32-bit dtypes pack along sublanes).
    itemsize = jnp.dtype(dtype).itemsize
    return max(8, 32 // max(itemsize, 1))


def _choose_batch_tile(rows: int, row_bytes: int, dtype,
                       vmem_budget_bytes: int) -> int:
    """Rows written per grid step.

    Sized so 2 (double buffer) * TB * row_bytes stays inside the VMEM budget.
    TB is either all rows, or a dtype-aware sublane multiple, preferring a TB
    that divides `rows` so the final block is not a masked partial writeback.
    """
    sub = _sublane_multiple(dtype)
    tb = max(1, vmem_budget_bytes // (2 * max(row_bytes, 1)))
    if tb >= rows:
        return rows
    tb = (tb // sub) * sub
    if tb < sub:
        tb = sub
    if tb >= rows:
        return rows
    # Prefer a divisor of `rows` (down to tb/2) to avoid a ragged last block.
    lo = max(sub, (tb // 2 // sub) * sub)
    for cand in range(tb, lo - 1, -sub):
        if rows % cand == 0:
            return cand
    return tb


def random_init_forward(x: jax.Array, u0: jax.Array, v0: jax.Array, *,
                        force_kernel: bool = False,
                        vmem_budget_bytes: int = 24 << 20):
    """RandomInit.forward: broadcast u0 (M,R), v0 (N,R) over x's batch dims."""
    batch_dims = x.shape[:-2]
    B = math.prod(batch_dims) if batch_dims else 1
    M, R = u0.shape
    N, Rv = v0.shape
    assert R == Rv, "u0 and v0 must share the rank dimension"
    dtype = u0.dtype
    MR, NR = M * R, N * R

    total_out_bytes = B * (MR + NR) * dtype.itemsize
    if not force_kernel and total_out_bytes < (1 << 20):
        # Tiny output: a pallas_call only adds fixed launch/DMA overhead over an
        # XLA broadcast that may fuse into consumers.
        u = jnp.broadcast_to(u0, (*batch_dims, M, R))
        v = jnp.broadcast_to(v0, (*batch_dims, N, R))
        return u, v

    # ---- Lane-dense grouping: smallest G with G*MR % 128 == 0 and G*NR % 128 == 0.
    g_u = 128 // math.gcd(MR, 128)
    g_v = 128 // math.gcd(NR, 128)
    G = (g_u * g_v) // math.gcd(g_u, g_v)          # lcm(g_u, g_v)
    if G > B or B % G != 0:
        # Fall back to the un-grouped layout (correct, just masked lane stores).
        G = 1

    rows = B // G
    row_u, row_v = G * MR, G * NR

    # Broadcast source built once in the wrapper (outside the grid loop).
    u0f = u0.reshape(1, MR)
    v0f = v0.reshape(1, NR)
    if G > 1:
        u0f = jnp.tile(u0f, (1, G))
        v0f = jnp.tile(v0f, (1, G))

    row_bytes = (row_u + row_v) * dtype.itemsize
    TB = _choose_batch_tile(rows, row_bytes, dtype, vmem_budget_bytes)
    grid = (pl.cdiv(rows, TB),)

    grid_spec = pltpu.PrefetchScalarGridSpec(
        num_scalar_prefetch=0,
        grid=grid,
        in_specs=[
            pl.BlockSpec((1, row_u), lambda b: (0, 0)),   # u0 slab, reused each step
            pl.BlockSpec((1, row_v), lambda b: (0, 0)),   # v0 slab, reused each step
        ],
        out_specs=[
            pl.BlockSpec((TB, row_u), lambda b: (b, 0)),
            pl.BlockSpec((TB, row_v), lambda b: (b, 0)),
        ],
    )

    cost = pl.CostEstimate(
        flops=0,
        transcendentals=0,
        bytes_accessed=total_out_bytes + (row_u + row_v) * dtype.itemsize,
    )

    u_flat, v_flat = pl.pallas_call(
        _random_init_kernel,
        out_shape=(
            jax.ShapeDtypeStruct((rows, row_u), dtype),
            jax.ShapeDtypeStruct((rows, row_v), dtype),
        ),
        grid_spec=grid_spec,
        cost_estimate=cost,
        compiler_params=pltpu.CompilerParams(
            dimension_semantics=("parallel",),
            vmem_limit_bytes=40 << 20,
        ),
    )(u0f, v0f)

    # Row-major view back to (*batch_dims, M/N, R) -- free at the XLA level.
    u = u_flat.reshape(*batch_dims, M, R)
    v = v_flat.reshape(*batch_dims, N, R)
    return u, v


if __name__ == "__main__":
    key = jax.random.PRNGKey(0)
    ku, kv, kx1, kx2 = jax.random.split(key, 4)

    M, N, rank = 16, 12, 4
    # Module-construction-time state: nn.init.uniform_ default is U(0, 1).
    u0 = jax.random.uniform(ku, (M, rank), dtype=jnp.float32)
    v0 = jax.random.uniform(kv, (N, rank), dtype=jnp.float32)

    # --- Test 1: small batch exactly as the module implies (x: (2, M, N)).
    #     B=2 is not divisible by the grouping factor -> un-grouped fallback path.
    x1 = jax.random.normal(kx1, (2, M, N), dtype=jnp.float32)
    u_out, v_out = random_init_forward(x1, u0, v0, force_kernel=True)
    jax.block_until_ready((u_out, v_out))
    assert u_out.shape == (2, M, rank) and v_out.shape == (2, N, rank)
    assert jnp.array_equal(u_out, jnp.broadcast_to(u0, (2, M, rank)))
    assert jnp.array_equal(v_out, jnp.broadcast_to(v0, (2, N, rank)))

    # --- Test 2: multi-dim batch exercising the lane-dense grouped layout and a
    #     multi-step grid (tiny VMEM budget forces several grid steps).
    x2 = jax.random.normal(kx2, (16, 16, M, N), dtype=jnp.float32)
    u_out2, v_out2 = random_init_forward(
        x2, u0, v0, force_kernel=True, vmem_budget_bytes=1 << 14)
    jax.block_until_ready((u_out2, v_out2))
    assert u_out2.shape == (16, 16, M, rank) and v_out2.shape == (16, 16, N, rank)
    assert jnp.array_equal(u_out2, jnp.broadcast_to(u0, (16, 16, M, rank)))
    assert jnp.array_equal(v_out2, jnp.broadcast_to(v0, (16, 16, N, rank)))

    print("KERNEL_OK")
</pallas_src>

<mosaic_0001>
module attributes {stable_mosaic.version = 11 : i64} {
  func.func @_random_init_kernel(%arg0: i32, %arg1: memref<1x64xf32, #tpu.memory_space<vmem>>, %arg2: memref<1x48xf32, #tpu.memory_space<vmem>>, %arg3: memref<2x64xf32, #tpu.memory_space<vmem>>, %arg4: memref<2x48xf32, #tpu.memory_space<vmem>>) attributes {dimension_semantics = [#tpu.dimension_semantics<parallel>], iteration_bounds = array<i64: 1>, scalar_prefetch = 0 : i64, scratch_operands = 0 : i64, tpu.core_type = #tpu.core_type<tc>, window_params = [{pipeline_mode = #tpu.pipeline_mode<synchronous>, transform_indices = @transform_0, window_bounds = array<i64: 1, 64>}, {pipeline_mode = #tpu.pipeline_mode<synchronous>, transform_indices = @transform_1, window_bounds = array<i64: 1, 48>}, {transform_indices = @transform_2, window_bounds = array<i64: 2, 64>}, {transform_indices = @transform_3, window_bounds = array<i64: 2, 48>}]} {
    %c0 = arith.constant 0 : index
    %c0_0 = arith.constant 0 : index
    %0 = vector.load %arg1[%c0, %c0_0] : memref<1x64xf32, #tpu.memory_space<vmem>>, vector<1x64xf32>
    %1 = vector.shape_cast %0 : vector<1x64xf32> to vector<1x64xf32>
    %2 = vector.broadcast %1 : vector<1x64xf32> to vector<2x64xf32>
    %c0_1 = arith.constant 0 : index
    %c0_2 = arith.constant 0 : index
    %3 = vector.load %arg3[%c0_1, %c0_2] : memref<2x64xf32, #tpu.memory_space<vmem>>, vector<2x64xf32>
    tpu.vector_store %arg3[%c0_1, %c0_2], %2 {strides = array<i32>} : memref<2x64xf32, #tpu.memory_space<vmem>>, vector<2x64xf32>,
    %c0_3 = arith.constant 0 : index
    %c0_4 = arith.constant 0 : index
    %4 = vector.load %arg2[%c0_3, %c0_4] : memref<1x48xf32, #tpu.memory_space<vmem>>, vector<1x48xf32>
    %5 = vector.shape_cast %4 : vector<1x48xf32> to vector<1x48xf32>
    %6 = vector.broadcast %5 : vector<1x48xf32> to vector<2x48xf32>
    %c0_5 = arith.constant 0 : index
    %c0_6 = arith.constant 0 : index
    %7 = vector.load %arg4[%c0_5, %c0_6] : memref<2x48xf32, #tpu.memory_space<vmem>>, vector<2x48xf32>
    tpu.vector_store %arg4[%c0_5, %c0_6], %6 {strides = array<i32>} : memref<2x48xf32, #tpu.memory_space<vmem>>, vector<2x48xf32>,
    return
  }
  func.func @transform_0(%arg0: i32) -> (i32, i32) {
    %c0_i32 = arith.constant 0 : i32
    %c0_i32_0 = arith.constant 0 : i32
    %c0_i32_1 = arith.constant 0 : i32
    return %c0_i32, %c0_i32_0 : i32, i32
  }
  func.func @transform_1(%arg0: i32) -> (i32, i32) {
    %c0_i32 = arith.constant 0 : i32
    %c0_i32_0 = arith.constant 0 : i32
    %c0_i32_1 = arith.constant 0 : i32
    return %c0_i32, %c0_i32_0 : i32, i32
  }
  func.func @transform_2(%arg0: i32) -> (i32, i32) {
    %c0_i32 = arith.constant 0 : i32
    %c0_i32_0 = arith.constant 0 : i32
    return %arg0, %c0_i32 : i32, i32
  }
  func.func @transform_3(%arg0: i32) -> (i32, i32) {
    %c0_i32 = arith.constant 0 : i32
    %c0_i32_0 = arith.constant 0 : i32
    return %arg0, %c0_i32 : i32, i32
  }
}

</mosaic_0001>

<llo_original>
// kernel: tpu_custom_call.1
$region0: #{tpu_custom_call.1}
  #allocation0 [shape = 'u32[]', space=smem, size = 0x4, offset = 0x4, fixed_abs, tag = 'smem constant byte address 0x4 - core index']
  #allocation1 [shape = 'u32[144,128]{1,0:T(1,128)}', space=vmem, size = 0x12000, scoped, tag = 'internal scratch']
  %s0 = inlined_call_operand.hbm [shape: f32[1,64], index: 0, kind: input, shape index: {}]
  %s1 = inlined_call_operand.vmem [shape: f32[1,48], index: 1, kind: input, shape index: {}]
  %s2 = inlined_call_operand.hbm [shape: f32[2,64], index: 2, kind: output, shape index: {0}]
  %s3 = inlined_call_operand.hbm [shape: f32[2,48], index: 3, kind: output, shape index: {1}]
  %4 = xla_tuple %s2, %s3
  %s5 = sld [smem:[#allocation0]]
  $region30: #{tpu_custom_call.1} parent=0
    _
  %s7 = ssub.s32 1, %s5
  %s8 = scalar_select 0, %s7, %s5
  $region1: #{tpu_custom_call.1} parent=0
    #allocation2 [shape = 'u8[512]{0}', space=vmem, size = 0x400, scoped, tag = 'input window, operand 0, single buffered']
    #allocation3 [shape = 's32[1]{0}', space=sflag, size = 0x4, scoped, tag = 'scoped memory for tpu_custom_call.1']
    #allocation4 [shape = 's32[1]{0}', space=sflag, size = 0x4, scoped, tag = 'scoped memory for tpu_custom_call.1']
    #allocation5 [shape = 'u8[1024]{0}', space=vmem, size = 0x400, scoped, tag = 'output window, operand 0, single buffered']
    #allocation6 [shape = 'u8[1024]{0}', space=vmem, size = 0x400, scoped, tag = 'output window, operand 1, single buffered']
    #allocation7 [shape = 's32[1]{0}', space=sflag, size = 0x4, scoped, tag = 'scoped memory for tpu_custom_call.1']
    %9 = vsyncpa [#allocation3], 0
    %10 = vsyncpa [#allocation4], 0
    %11 = vsyncpa [#allocation7], 0
    // Predicated region
    $region2: #{tpu_custom_call.1} parent=1 // pred_check
      _
    $region3: #{tpu_custom_call.1} parent=1 // pred_check_branch
      %13 = sbr.rel (0) target = $region5
    $region4: #{tpu_custom_call.1} parent=1 // pred_region
      %s15 = ssub.s32 16, 16
      %16 = vsyncadd [#allocation3], %s15
      %s18 = sshll.u32 [#allocation2], 4
      %s19 = int_to_ptr.vmem [resolvable:$true] %s18
      %21 = dma.hbm_to_vmem [thread:$0]  %s0, 16, %s19, [#allocation3]
    $region5: #{tpu_custom_call.1} parent=1 // pred_fallthru
      _
    // Predicated region
    $region6: #{tpu_custom_call.1} parent=1 // pred_check
      _
    $region7: #{tpu_custom_call.1} parent=1 // pred_check_branch
      %23 = sbr.rel (0) target = $region9
    $region8: #{tpu_custom_call.1} parent=1 // pred_region
      _
    $region9: #{tpu_custom_call.1} parent=1 // pred_fallthru
      _
    // Predicated region
    $region10: #{tpu_custom_call.1} parent=1 // pred_check
      _
    $region11: #{tpu_custom_call.1} parent=1 // pred_check_branch
      %25 = sbr.rel (0) target = $region13
    $region12: #{tpu_custom_call.1} parent=1 // pred_region
      %26 = dma.done [#allocation3], 16
    $region13: #{tpu_custom_call.1} parent=1 // pred_fallthru
      _
    %v27 = vld [vmem:[#allocation2] sm:$0x1]
    %v29 = vlaneseq
    %v30 = vshrl.u32 %v29, 7
    %v31 = vsub.s32 0, %v30
    %v32 = vrot.slane %v27, %v31
    %vm34 = vcmask 517120
    %35 = vst.msk [vmem:[#allocation5] sm:$0x3] %vm34, %v32
    %v36 = vld [vmem:[%s1] sm:$0x1]
    %v38 = vlaneseq
    %v39 = vshrl.u32 %v38, 7
    %v40 = vsub.s32 0, %v39
    %v41 = vrot.slane %v36, %v40
    %vm43 = vcmask 386048
    %44 = vst.msk [vmem:[#allocation6] sm:$0x3] %vm43, %v41
    // Predicated region
    $region14: #{tpu_custom_call.1} parent=1 // pred_check
      _
    $region15: #{tpu_custom_call.1} parent=1 // pred_check_branch
      %46 = sbr.rel (0) target = $region17
    $region16: #{tpu_custom_call.1} parent=1 // pred_region
      %s48 = ssub.s32 32, 32
      %49 = vsyncadd [#allocation4], %s48
      %s51 = sshll.u32 [#allocation5], 4
      %s52 = int_to_ptr.vmem [resolvable:$true] %s51
      %54 = dma.vmem_to_hbm [thread:$0]  %s52, 32, %s2, [#allocation4]
    $region17: #{tpu_custom_call.1} parent=1 // pred_fallthru
      _
    // Predicated region
    $region18: #{tpu_custom_call.1} parent=1 // pred_check
      _
    $region19: #{tpu_custom_call.1} parent=1 // pred_check_branch
      %56 = sbr.rel (0) target = $region21
    $region20: #{tpu_custom_call.1} parent=1 // pred_region
      %s58 = ssub.s32 32, 32
      %59 = vsyncadd [#allocation7], %s58
      %s61 = sshll.u32 [#allocation6], 4
      %s62 = int_to_ptr.vmem [resolvable:$true] %s61
      %64 = dma.vmem_to_hbm [thread:$0]  %s62, 32, %s3, [#allocation7]
    $region21: #{tpu_custom_call.1} parent=1 // pred_fallthru
      _
    // Predicated region
    $region22: #{tpu_custom_call.1} parent=1 // pred_check
      _
    $region23: #{tpu_custom_call.1} parent=1 // pred_check_branch
      %66 = sbr.rel (0) target = $region25
    $region24: #{tpu_custom_call.1} parent=1 // pred_region
      %67 = dma.done [#allocation4], 32
    $region25: #{tpu_custom_call.1} parent=1 // pred_fallthru
      _
    // Predicated region
    $region26: #{tpu_custom_call.1} parent=1 // pred_check
      _
    $region27: #{tpu_custom_call.1} parent=1 // pred_check_branch
      %69 = sbr.rel (0) target = $region29
    $region28: #{tpu_custom_call.1} parent=1 // pred_region
      %70 = dma.done [#allocation7], 32
    $region29: #{tpu_custom_call.1} parent=1 // pred_fallthru
      _
    %71 = vsyncpa [#allocation3], 1
    %72 = vsyncpa [#allocation4], 1
    %73 = vsyncpa [#allocation7], 1

</llo_original>
